<compile_context>
chip_gen: v7x
topology: tpu7x:2x2x1
jax: 0.10.0
libtpu: 0.0.40
codegen_flags: <defaults>
</compile_context>

<pallas_src>
import functools

import jax
import jax.numpy as jnp
from jax.experimental import pallas as pl
from jax.experimental.pallas import tpu as pltpu

HIDDEN1 = 128       # fc1 output width (already lane-dense)
HIDDEN2 = 64        # fc2 output width
HIDDEN2_PAD = 128   # fc2's 64 outputs zero-padded to 128 lanes
LANE = 128
SUBLANE = 8


def _align(n, m):
    return ((n + m - 1) // m) * m


def hash_classifier_kernel(x_ref, w1_ref, b1_ref, w2_ref, b2_ref, w3t_ref, b3t_ref,
                           o_ref, *, compute_dtype):
    # One batch tile per grid step: 3 MXU matmuls + VPU bias/ReLU, all in VMEM.
    x = x_ref[...].astype(compute_dtype)
    h1 = jnp.dot(x, w1_ref[...].astype(compute_dtype),
                 preferred_element_type=jnp.float32) + b1_ref[...]
    h1 = jnp.maximum(h1, 0.0)
    h2 = jnp.dot(h1.astype(compute_dtype), w2_ref[...].astype(compute_dtype),
                 preferred_element_type=jnp.float32) + b2_ref[...]
    h2 = jnp.maximum(h2, 0.0)
    # fc3 emitted transposed: logits_t[c, b] = sum_k w3t[c, k] * h2[b, k] + b3[c]
    # -> output block is [C_pad, TB] with the batch on the lane axis (lane-dense,
    #    unmasked vst for full tiles) instead of a 128-lane padded [TB, 128] slab.
    logits_t = jax.lax.dot_general(
        w3t_ref[...].astype(compute_dtype), h2.astype(compute_dtype),
        dimension_numbers=(((1,), (1,)), ((), ())),
        preferred_element_type=jnp.float32) + b3t_ref[...]
    o_ref[...] = logits_t.astype(o_ref.dtype)


def hash_classifier_forward(x, params, *, tb=4096, use_bf16=False):
    """x: [B, input_size] float32. params: w1/b1 [in,128]/[1,128], w2/b2 [128,64]/[1,64],
    w3/b3 [64,C]/[1,C]. Returns logits [B, C]."""
    w1, b1 = params["w1"], params["b1"]
    w2, b2 = params["w2"], params["b2"]
    w3, b3 = params["w3"], params["b3"]

    B, in_features = x.shape
    num_classes = w3.shape[1]
    c_pad = max(SUBLANE, _align(num_classes, SUBLANE))

    # --- Lane/sublane-dense zero padding of the narrow weight dims (tiny, one-off) ---
    w2p = jnp.pad(w2, ((0, 0), (0, HIDDEN2_PAD - HIDDEN2)))                 # [128, 128]
    b2p = jnp.pad(b2, ((0, 0), (0, HIDDEN2_PAD - HIDDEN2)))                 # [1, 128]
    # fc3 weight in [out, in] layout (transposed), zero-padded to [c_pad, 128].
    w3t = jnp.pad(w3.T, ((0, c_pad - num_classes), (0, HIDDEN2_PAD - HIDDEN2)))
    b3t = jnp.pad(b3.reshape(num_classes, 1), ((0, c_pad - num_classes), (0, 0)))

    # --- Batch tile: multiple of 128 (lane-dense transposed output), capped for
    #     v7x's VMEM, and sized so a batch spanning >1 tile gets >= 2 grid steps
    #     (megacore). Last block may be ragged; no wrapper-side pad of x. ---
    tb_cap = max(LANE, (min(tb, 4096) // LANE) * LANE)
    TB = min(tb_cap, max(LANE, _align((B + 1) // 2, LANE)))
    grid = (pl.cdiv(B, TB),)

    resident = lambda a: pl.BlockSpec(a.shape, lambda i: (0, 0))  # VMEM-resident weights

    weight_elems = w1.size + b1.size + w2p.size + b2p.size + w3t.size + b3t.size
    vmem_bytes = 4 * (2 * TB * (in_features + c_pad)   # double-buffered x / out tiles
                      + 2 * weight_elems               # resident weights (w/ margin)
                      + 2 * TB * HIDDEN1               # h1 / h2 f32 intermediates
                      + TB * c_pad)                    # transposed logits
    vmem_bytes = int(vmem_bytes) + (8 << 20)           # Mosaic matmul-scratch headroom
    vmem_bytes = max(vmem_bytes, 16 << 20)

    flops = 2 * B * (in_features * HIDDEN1 + HIDDEN1 * HIDDEN2_PAD + HIDDEN2_PAD * c_pad)
    bytes_accessed = 4 * (B * (in_features + c_pad) + weight_elems)

    compute_dtype = jnp.bfloat16 if use_bf16 else jnp.float32
    kernel = functools.partial(hash_classifier_kernel, compute_dtype=compute_dtype)

    out_t = pl.pallas_call(
        kernel,
        out_shape=jax.ShapeDtypeStruct((c_pad, B), jnp.float32),
        grid=grid,
        in_specs=[
            pl.BlockSpec((TB, in_features), lambda i: (i, 0)),   # x: tiled over batch
            resident(w1), resident(b1),
            resident(w2p), resident(b2p),
            resident(w3t), resident(b3t),
        ],
        out_specs=pl.BlockSpec((c_pad, TB), lambda i: (0, i)),   # batch on the lane axis
        compiler_params=pltpu.CompilerParams(
            dimension_semantics=("parallel",),
            vmem_limit_bytes=vmem_bytes,
        ),
        cost_estimate=pl.CostEstimate(
            flops=flops, transcendentals=0, bytes_accessed=bytes_accessed),
    )(x, w1, b1, w2p, b2p, w3t, b3t)

    # Tiny [c_pad, B] -> [B, num_classes] slice + transpose (32 B/row of useful
    # data, vs the previous 512 B/row padded-slab slice).
    return out_t[:num_classes, :].T


def init_params(key, input_size, num_classes):
    """Deterministic synthetic init (mimics nn.Linear's U(-1/sqrt(fan_in), 1/sqrt(fan_in)))."""
    ks = jax.random.split(key, 6)

    def linear(kw, kb, fan_in, fan_out):
        bound = 1.0 / jnp.sqrt(float(fan_in))
        w = jax.random.uniform(kw, (fan_in, fan_out), jnp.float32, -bound, bound)
        b = jax.random.uniform(kb, (1, fan_out), jnp.float32, -bound, bound)
        return w, b

    w1, b1 = linear(ks[0], ks[1], input_size, HIDDEN1)
    w2, b2 = linear(ks[2], ks[3], HIDDEN1, HIDDEN2)
    w3, b3 = linear(ks[4], ks[5], HIDDEN2, num_classes)
    return {"w1": w1, "b1": b1, "w2": w2, "b2": b2, "w3": w3, "b3": b3}


def reference_forward(x, p):
    h1 = jnp.maximum(x @ p["w1"] + p["b1"], 0.0)
    h2 = jnp.maximum(h1 @ p["w2"] + p["b2"], 0.0)
    return h2 @ p["w3"] + p["b3"]


if __name__ == "__main__":
    target_length = 64          # input_size from the module
    num_classes = 8             # synthetic stand-in for len(label_encoder.classes_)
    batch = 2

    key = jax.random.PRNGKey(0)
    k_x, k_p = jax.random.split(key)
    x = jax.random.normal(k_x, (batch, target_length), jnp.float32)
    params = init_params(k_p, target_length, num_classes)

    out = jax.block_until_ready(hash_classifier_forward(x, params))
    ref = reference_forward(x, params)
    assert out.shape == (batch, num_classes)
    assert jnp.allclose(out, ref, atol=1e-4, rtol=1e-4), "mismatch vs JAX reference"

    # Larger, non-tile-multiple batch exercises the ragged last block and the
    # >=2-step grid path (both v7x TensorCores).
    xb = jax.random.normal(jax.random.PRNGKey(1), (1037, target_length), jnp.float32)
    outb = jax.block_until_ready(hash_classifier_forward(xb, params))
    refb = reference_forward(xb, params)
    assert outb.shape == (1037, num_classes)
    assert jnp.allclose(outb, refb, atol=1e-4, rtol=1e-4), "mismatch vs JAX reference (batched)"

    print("KERNEL_OK")
</pallas_src>

<mosaic_0001>
module attributes {stable_mosaic.version = 11 : i64} {
  func.func @hash_classifier_kernel(%arg0: i32, %arg1: memref<128x64xf32, #tpu.memory_space<vmem>>, %arg2: memref<64x128xf32, #tpu.memory_space<vmem>>, %arg3: memref<1x128xf32, #tpu.memory_space<vmem>>, %arg4: memref<128x128xf32, #tpu.memory_space<vmem>>, %arg5: memref<1x128xf32, #tpu.memory_space<vmem>>, %arg6: memref<8x128xf32, #tpu.memory_space<vmem>>, %arg7: memref<8x1xf32, #tpu.memory_space<vmem>>, %arg8: memref<8x128xf32, #tpu.memory_space<vmem>>) attributes {dimension_semantics = [#tpu.dimension_semantics<parallel>], iteration_bounds = array<i64: 1>, scalar_prefetch = 0 : i64, scratch_operands = 0 : i64, tpu.core_type = #tpu.core_type<tc>, window_params = [{transform_indices = @transform_0, window_bounds = array<i64: 128, 64>}, {pipeline_mode = #tpu.pipeline_mode<synchronous>, transform_indices = @transform_1, window_bounds = array<i64: 64, 128>}, {pipeline_mode = #tpu.pipeline_mode<synchronous>, transform_indices = @transform_2, window_bounds = array<i64: 1, 128>}, {pipeline_mode = #tpu.pipeline_mode<synchronous>, transform_indices = @transform_3, window_bounds = array<i64: 128, 128>}, {pipeline_mode = #tpu.pipeline_mode<synchronous>, transform_indices = @transform_4, window_bounds = array<i64: 1, 128>}, {pipeline_mode = #tpu.pipeline_mode<synchronous>, transform_indices = @transform_5, window_bounds = array<i64: 8, 128>}, {pipeline_mode = #tpu.pipeline_mode<synchronous>, transform_indices = @transform_6, window_bounds = array<i64: 8, 1>}, {transform_indices = @transform_7, window_bounds = array<i64: 8, 128>}]} {
    %c0 = arith.constant 0 : index
    %c0_0 = arith.constant 0 : index
    %0 = vector.load %arg1[%c0, %c0_0] : memref<128x64xf32, #tpu.memory_space<vmem>>, vector<128x64xf32>
    %c0_1 = arith.constant 0 : index
    %c0_2 = arith.constant 0 : index
    %1 = vector.load %arg2[%c0_1, %c0_2] : memref<64x128xf32, #tpu.memory_space<vmem>>, vector<64x128xf32>
    %cst = arith.constant dense<0.000000e+00> : vector<128x128xf32>
    %2 = tpu.matmul %0, %1, %cst {dimension_numbers = #tpu.dot_dimension_numbers<[1], [0], [0], [1], [0, 0, 1, 1], [], []>} : vector<128x64xf32>, vector<64x128xf32>, vector<128x128xf32> -> vector<128x128xf32>
    %c0_3 = arith.constant 0 : index
    %c0_4 = arith.constant 0 : index
    %3 = vector.load %arg3[%c0_3, %c0_4] : memref<1x128xf32, #tpu.memory_space<vmem>>, vector<1x128xf32>
    %4 = vector.broadcast %3 : vector<1x128xf32> to vector<128x128xf32>
    %5 = arith.addf %2, %4 : vector<128x128xf32>
    %cst_5 = arith.constant 0.000000e+00 : f32
    %6 = vector.broadcast %cst_5 : f32 to vector<128x128xf32>
    %7 = arith.maximumf %5, %6 : vector<128x128xf32>
    %c0_6 = arith.constant 0 : index
    %c0_7 = arith.constant 0 : index
    %8 = vector.load %arg4[%c0_6, %c0_7] : memref<128x128xf32, #tpu.memory_space<vmem>>, vector<128x128xf32>
    %cst_8 = arith.constant dense<0.000000e+00> : vector<128x128xf32>
    %9 = tpu.matmul %7, %8, %cst_8 {dimension_numbers = #tpu.dot_dimension_numbers<[1], [0], [0], [1], [0, 0, 1, 1], [], []>} : vector<128x128xf32>, vector<128x128xf32>, vector<128x128xf32> -> vector<128x128xf32>
    %c0_9 = arith.constant 0 : index
    %c0_10 = arith.constant 0 : index
    %10 = vector.load %arg5[%c0_9, %c0_10] : memref<1x128xf32, #tpu.memory_space<vmem>>, vector<1x128xf32>
    %11 = vector.broadcast %10 : vector<1x128xf32> to vector<128x128xf32>
    %12 = arith.addf %9, %11 : vector<128x128xf32>
    %cst_11 = arith.constant 0.000000e+00 : f32
    %13 = vector.broadcast %cst_11 : f32 to vector<128x128xf32>
    %14 = arith.maximumf %12, %13 : vector<128x128xf32>
    %c0_12 = arith.constant 0 : index
    %c0_13 = arith.constant 0 : index
    %15 = vector.load %arg6[%c0_12, %c0_13] : memref<8x128xf32, #tpu.memory_space<vmem>>, vector<8x128xf32>
    %cst_14 = arith.constant dense<0.000000e+00> : vector<8x128xf32>
    %16 = tpu.matmul %15, %14, %cst_14 {dimension_numbers = #tpu.dot_dimension_numbers<[1], [1], [0], [0], [0, 0, 1, 0], [], []>} : vector<8x128xf32>, vector<128x128xf32>, vector<8x128xf32> -> vector<8x128xf32>
    %c0_15 = arith.constant 0 : index
    %c0_16 = arith.constant 0 : index
    %17 = vector.load %arg7[%c0_15, %c0_16] : memref<8x1xf32, #tpu.memory_space<vmem>>, vector<8x1xf32>
    %18 = vector.broadcast %17 : vector<8x1xf32> to vector<8x128xf32>
    %19 = arith.addf %16, %18 : vector<8x128xf32>
    %c0_17 = arith.constant 0 : index
    %c0_18 = arith.constant 0 : index
    %20 = vector.load %arg8[%c0_17, %c0_18] : memref<8x128xf32, #tpu.memory_space<vmem>>, vector<8x128xf32>
    tpu.vector_store %arg8[%c0_17, %c0_18], %19 {strides = array<i32>} : memref<8x128xf32, #tpu.memory_space<vmem>>, vector<8x128xf32>,
    return
  }
  func.func @transform_0(%arg0: i32) -> (i32, i32) {
    %c0_i32 = arith.constant 0 : i32
    %c0_i32_0 = arith.constant 0 : i32
    return %arg0, %c0_i32 : i32, i32
  }
  func.func @transform_1(%arg0: i32) -> (i32, i32) {
    %c0_i32 = arith.constant 0 : i32
    %c0_i32_0 = arith.constant 0 : i32
    %c0_i32_1 = arith.constant 0 : i32
    return %c0_i32, %c0_i32_0 : i32, i32
  }
  func.func @transform_2(%arg0: i32) -> (i32, i32) {
    %c0_i32 = arith.constant 0 : i32
    %c0_i32_0 = arith.constant 0 : i32
    %c0_i32_1 = arith.constant 0 : i32
    return %c0_i32, %c0_i32_0 : i32, i32
  }
  func.func @transform_3(%arg0: i32) -> (i32, i32) {
    %c0_i32 = arith.constant 0 : i32
    %c0_i32_0 = arith.constant 0 : i32
    %c0_i32_1 = arith.constant 0 : i32
    return %c0_i32, %c0_i32_0 : i32, i32
  }
  func.func @transform_4(%arg0: i32) -> (i32, i32) {
    %c0_i32 = arith.constant 0 : i32
    %c0_i32_0 = arith.constant 0 : i32
    %c0_i32_1 = arith.constant 0 : i32
    return %c0_i32, %c0_i32_0 : i32, i32
  }
  func.func @transform_5(%arg0: i32) -> (i32, i32) {
    %c0_i32 = arith.constant 0 : i32
    %c0_i32_0 = arith.constant 0 : i32
    %c0_i32_1 = arith.constant 0 : i32
    return %c0_i32, %c0_i32_0 : i32, i32
  }
  func.func @transform_6(%arg0: i32) -> (i32, i32) {
    %c0_i32 = arith.constant 0 : i32
    %c0_i32_0 = arith.constant 0 : i32
    %c0_i32_1 = arith.constant 0 : i32
    return %c0_i32, %c0_i32_0 : i32, i32
  }
  func.func @transform_7(%arg0: i32) -> (i32, i32) {
    %c0_i32 = arith.constant 0 : i32
    %c0_i32_0 = arith.constant 0 : i32
    return %c0_i32, %arg0 : i32, i32
  }
}

</mosaic_0001>

<llo_original>
// kernel: tpu_custom_call.1
$region0: #{tpu_custom_call.1}
  #allocation0 [shape = 'u32[]', space=smem, size = 0x4, offset = 0x4, fixed_abs, tag = 'smem constant byte address 0x4 - core index']
  #allocation1 [shape = 'u32[144,128]{1,0:T(1,128)}', space=vmem, size = 0x12000, scoped, tag = 'internal scratch']
  %s0 = inlined_call_operand.vmem [shape: f32[2,64], index: 0, kind: input, shape index: {}]
  %s1 = inlined_call_operand.hbm [shape: f32[64,128], index: 1, kind: input, shape index: {}]
  %s2 = inlined_call_operand.vmem [shape: f32[1,128], index: 2, kind: input, shape index: {}]
  %s3 = inlined_call_operand.hbm [shape: f32[128,128], index: 3, kind: input, shape index: {}]
  %s4 = inlined_call_operand.vmem [shape: f32[1,128], index: 4, kind: input, shape index: {}]
  %s5 = inlined_call_operand.vmem [shape: f32[8,128], index: 5, kind: input, shape index: {}]
  %s6 = inlined_call_operand.vmem [shape: f32[8,1], index: 6, kind: input, shape index: {}]
  %s7 = inlined_call_operand.vmem [shape: f32[8,2], index: 7, kind: output, shape index: {}]
  %s8 = sld [smem:[#allocation0]]
  $region46: #{tpu_custom_call.1} parent=0
    _
  %s10 = ssub.s32 1, %s8
  %s11 = scalar_select 0, %s10, %s8
  $region1: #{tpu_custom_call.1} parent=0
    #allocation2 [shape = 'u8[32768]{0}', space=vmem, size = 0x8000, scoped, tag = 'input window, operand 1, single buffered']
    #allocation3 [shape = 's32[1]{0}', space=sflag, size = 0x4, scoped, tag = 'scoped memory for tpu_custom_call.1']
    #allocation4 [shape = 'u8[65536]{0}', space=vmem, size = 0x10000, scoped, tag = 'input window, operand 3, single buffered']
    #allocation5 [shape = 's32[1]{0}', space=sflag, size = 0x4, scoped, tag = 'scoped memory for tpu_custom_call.1']
    %12 = vsyncpa [#allocation3], 0
    %13 = vsyncpa [#allocation5], 0
    // Predicated region
    $region2: #{tpu_custom_call.1} parent=1 // pred_check
      _
    $region3: #{tpu_custom_call.1} parent=1 // pred_check_branch
      %15 = sbr.rel (0) target = $region5
    $region4: #{tpu_custom_call.1} parent=1 // pred_region
      _
    $region5: #{tpu_custom_call.1} parent=1 // pred_fallthru
      _
    // Predicated region
    $region6: #{tpu_custom_call.1} parent=1 // pred_check
      _
    $region7: #{tpu_custom_call.1} parent=1 // pred_check_branch
      %17 = sbr.rel (0) target = $region9
    $region8: #{tpu_custom_call.1} parent=1 // pred_region
      %s19 = ssub.s32 1024, 1024
      %20 = vsyncadd [#allocation3], %s19
      %s21 = sshll.u32 [#allocation2], 4
      %s22 = int_to_ptr.vmem [resolvable:$true] %s21
      %27 = dma.hbm_to_vmem [thread:$0]  %s1, 1024, %s22, [#allocation3], 128, 128, 8
    $region9: #{tpu_custom_call.1} parent=1 // pred_fallthru
      _
    // Predicated region
    $region10: #{tpu_custom_call.1} parent=1 // pred_check
      _
    $region11: #{tpu_custom_call.1} parent=1 // pred_check_branch
      %29 = sbr.rel (0) target = $region13
    $region12: #{tpu_custom_call.1} parent=1 // pred_region
      _
    $region13: #{tpu_custom_call.1} parent=1 // pred_fallthru
      _
    // Predicated region
    $region14: #{tpu_custom_call.1} parent=1 // pred_check
      _
    $region15: #{tpu_custom_call.1} parent=1 // pred_check_branch
      %31 = sbr.rel (0) target = $region17
    $region16: #{tpu_custom_call.1} parent=1 // pred_region
      %s33 = ssub.s32 2048, 2048
      %34 = vsyncadd [#allocation5], %s33
      %s35 = sshll.u32 [#allocation4], 4
      %s36 = int_to_ptr.vmem [resolvable:$true] %s35
      %41 = dma.hbm_to_vmem [thread:$0]  %s3, 2048, %s36, [#allocation5], 128, 128, 8
    $region17: #{tpu_custom_call.1} parent=1 // pred_fallthru
      _
    // Predicated region
    $region18: #{tpu_custom_call.1} parent=1 // pred_check
      _
    $region19: #{tpu_custom_call.1} parent=1 // pred_check_branch
      %43 = sbr.rel (0) target = $region21
    $region20: #{tpu_custom_call.1} parent=1 // pred_region
      _
    $region21: #{tpu_custom_call.1} parent=1 // pred_fallthru
      _
    // Predicated region
    $region22: #{tpu_custom_call.1} parent=1 // pred_check
      _
    $region23: #{tpu_custom_call.1} parent=1 // pred_check_branch
      %45 = sbr.rel (0) target = $region25
    $region24: #{tpu_custom_call.1} parent=1 // pred_region
      _
    $region25: #{tpu_custom_call.1} parent=1 // pred_fallthru
      _
    // Predicated region
    $region26: #{tpu_custom_call.1} parent=1 // pred_check
      _
    $region27: #{tpu_custom_call.1} parent=1 // pred_check_branch
      %47 = sbr.rel (0) target = $region29
    $region28: #{tpu_custom_call.1} parent=1 // pred_region
      _
    $region29: #{tpu_custom_call.1} parent=1 // pred_fallthru
      _
    // Predicated region
    $region30: #{tpu_custom_call.1} parent=1 // pred_check
      _
    $region31: #{tpu_custom_call.1} parent=1 // pred_check_branch
      %49 = sbr.rel (0) target = $region33
    $region32: #{tpu_custom_call.1} parent=1 // pred_region
      %50 = dma.done [#allocation3], 1024
    $region33: #{tpu_custom_call.1} parent=1 // pred_fallthru
      _
    // Predicated region
    $region34: #{tpu_custom_call.1} parent=1 // pred_check
      _
    $region35: #{tpu_custom_call.1} parent=1 // pred_check_branch
      %52 = sbr.rel (0) target = $region37
    $region36: #{tpu_custom_call.1} parent=1 // pred_region
      %53 = dma.done [#allocation5], 2048
    $region37: #{tpu_custom_call.1} parent=1 // pred_fallthru
      _
    %v54 = vld [vmem:[%s0] sm:$0xff]
    %v55 = vld [vmem:[%s0 + $0x8] sm:$0xff]
    %v56 = vld [vmem:[%s0 + $0x10] sm:$0xff]
    %v57 = vld [vmem:[%s0 + $0x18] sm:$0xff]
    %v58 = vld [vmem:[%s0 + $0x20] sm:$0xff]
    %v59 = vld [vmem:[%s0 + $0x28] sm:$0xff]
    %v60 = vld [vmem:[%s0 + $0x30] sm:$0xff]
    %v61 = vld [vmem:[%s0 + $0x38] sm:$0xff]
    %v62 = vld [vmem:[%s0 + $0x40] sm:$0xff]
    %v63 = vld [vmem:[%s0 + $0x48] sm:$0xff]
    %v64 = vld [vmem:[%s0 + $0x50] sm:$0xff]
    %v65 = vld [vmem:[%s0 + $0x58] sm:$0xff]
    %v66 = vld [vmem:[%s0 + $0x60] sm:$0xff]
    %v67 = vld [vmem:[%s0 + $0x68] sm:$0xff]
    %v68 = vld [vmem:[%s0 + $0x70] sm:$0xff]
    %v69 = vld [vmem:[%s0 + $0x78] sm:$0xff]
    %v70 = vld [vmem:[#allocation2] sm:$0xff]
    %v71 = vld [vmem:[#allocation2 + $0x8] sm:$0xff]
    %v72 = vld [vmem:[#allocation2 + $0x10] sm:$0xff]
    %v73 = vld [vmem:[#allocation2 + $0x18] sm:$0xff]
    %v74 = vld [vmem:[#allocation2 + $0x20] sm:$0xff]
    %v75 = vld [vmem:[#allocation2 + $0x28] sm:$0xff]
    %v76 = vld [vmem:[#allocation2 + $0x30] sm:$0xff]
    %v77 = vld [vmem:[#allocation2 + $0x38] sm:$0xff]
    %v78 = vld [vmem:[%s2] sm:$0x1]
    %v80 = vlaneseq
    %v81 = vshrl.u32 %v80, 7
    %v82 = vsub.s32 0, %v81
    %v83 = vrot.slane %v78, %v82
    %vm85 = vcmask 523264
    %v87 = vsel %vm85, %v54, 0
    %v90 = vsel %vm85, %v55, 0
    %v93 = vsel %vm85, %v56, 0
    %v96 = vsel %vm85, %v57, 0
    %v99 = vsel %vm85, %v58, 0
    %v102 = vsel %vm85, %v59, 0
    %v105 = vsel %vm85, %v60, 0
    %v108 = vsel %vm85, %v61, 0
    %v111 = vsel %vm85, %v62, 0
    %v114 = vsel %vm85, %v63, 0
    %v117 = vsel %vm85, %v64, 0
    %v120 = vsel %vm85, %v65, 0
    %v123 = vsel %vm85, %v66, 0
    %v126 = vsel %vm85, %v67, 0
    %v129 = vsel %vm85, %v68, 0
    %v132 = vsel %vm85, %v69, 0
    %134 = vmatprep.subr.mxu0 0.0
    %135 = vmatpush1.msra.mxu0 %v70
    %136 = vmatprep.subr.mxu0 0.0
    %137 = vmatpush1.msra.mxu0 %v71
    %138 = vmatprep.subr.mxu0 0.0
    %139 = vmatpush1.msra.mxu0 %v72
    %140 = vmatprep.subr.mxu0 0.0
    %141 = vmatpush1.msra.mxu0 %v73
    %142 = vmatprep.subr.mxu0 0.0
    %143 = vmatpush1.msra.mxu0 %v74
    %144 = vmatprep.subr.mxu0 0.0
    %145 = vmatpush1.msra.mxu0 %v75
    %146 = vmatprep.subr.mxu0 0.0
    %147 = vmatpush1.msra.mxu0 %v76
    %148 = vmatprep.subr.mxu0 0.0
    %149 = vmatpush1.msra.mxu0 %v77
    %150 = vmatprep.subr.mxu0 0.0
    %151 = vmatpush1.msra.mxu0 0.0
    %152 = vmatprep.subr.mxu0 0.0
    %153 = vmatpush1.msra.mxu0 0.0
    %154 = vmatprep.subr.mxu0 0.0
    %155 = vmatpush1.msra.mxu0 0.0
    %156 = vmatprep.subr.mxu0 0.0
    %157 = vmatpush1.msra.mxu0 0.0
    %158 = vmatprep.subr.mxu0 0.0
    %159 = vmatpush1.msra.mxu0 0.0
    %160 = vmatprep.subr.mxu0 0.0
    %161 = vmatpush1.msra.mxu0 0.0
    %162 = vmatprep.subr.mxu0 0.0
    %163 = vmatpush1.msra.mxu0 0.0
    %164 = vmatprep.subr.mxu0 0.0
    %165 = vmatpush1.msra.mxu0 0.0
    %166 = vmatprep.subr.mxu0 0.0
    %167 = vmatpush1.msra.mxu0 0.0
    %168 = vmatprep.subr.mxu0 0.0
    %169 = vmatpush1.msra.mxu0 0.0
    %170 = vmatprep.subr.mxu0 0.0
    %171 = vmatpush1.msra.mxu0 0.0
    %172 = vmatprep.subr.mxu0 0.0
    %173 = vmatpush1.msra.mxu0 0.0
    %174 = vmatprep.subr.mxu0 0.0
    %175 = vmatpush1.msra.mxu0 0.0
    %176 = vmatprep.subr.mxu0 0.0
    %177 = vmatpush1.msra.mxu0 0.0
    %178 = vmatprep.subr.mxu0 0.0
    %179 = vmatpush1.msra.mxu0 0.0
    %180 = vmatprep.subr.mxu0 0.0
    %181 = vmatpush1.msra.mxu0 0.0
    %182 = vmatprep.subr.mxu0 0.0
    %183 = vmatpush1.msra.mxu0 0.0
    %184 = vmatprep.subr.mxu0 0.0
    %185 = vmatpush1.msra.mxu0 0.0
    %186 = vmatprep.subr.mxu0 0.0
    %187 = vmatpush1.msra.mxu0 0.0
    %188 = vmatprep.subr.mxu0 0.0
    %189 = vmatpush1.msra.mxu0 0.0
    %190 = vmatprep.subr.mxu0 0.0
    %191 = vmatpush1.msra.mxu0 0.0
    %192 = vmatprep.subr.mxu0 0.0
    %193 = vmatpush1.msra.mxu0 0.0
    %194 = vmatprep.subr.mxu0 0.0
    %195 = vmatpush1.msra.mxu0 0.0
    %196 = vmatprep.subr.mxu0 0.0
    %197 = vmatpush1.msra.mxu0 0.0
    %198 = vmatprep.mubr.f32.mxu0 0.0
    %199 = vmatmul.mubr.f32.gmra.mrb[0].mxu0 %v87
    %v200 = vpop.f32.mrb[0].mxu0
    %v201 = vadd.f32 %v83, %v200
    %v202 = vpop.f32.mrb[0].mxu0
    %203 = vmatprep.mubr.f32.mxu0 0.0
    %204 = vmatmul.mubr.f32.gmra.mrb[0].mxu0 %v90
    %v205 = vpop.f32.mrb[0].mxu0
    %v206 = vadd.f32 %v83, %v205
    %v207 = vpop.f32.mrb[0].mxu0
    %208 = vmatprep.mubr.f32.mxu0 0.0
    %209 = vmatmul.mubr.f32.gmra.mrb[0].mxu0 %v93
    %v210 = vpop.f32.mrb[0].mxu0
    %v211 = vadd.f32 %v83, %v210
    %v212 = vpop.f32.mrb[0].mxu0
    %213 = vmatprep.mubr.f32.mxu0 0.0
    %214 = vmatmul.mubr.f32.gmra.mrb[0].mxu0 %v96
    %v215 = vpop.f32.mrb[0].mxu0
    %v216 = vadd.f32 %v83, %v215
    %v217 = vpop.f32.mrb[0].mxu0
    %218 = vmatprep.mubr.f32.mxu0 0.0
    %219 = vmatmul.mubr.f32.gmra.mrb[0].mxu0 %v99
    %v220 = vpop.f32.mrb[0].mxu0
    %v221 = vadd.f32 %v83, %v220
    %v222 = vpop.f32.mrb[0].mxu0
    %223 = vmatprep.mubr.f32.mxu0 0.0
    %224 = vmatmul.mubr.f32.gmra.mrb[0].mxu0 %v102
    %v225 = vpop.f32.mrb[0].mxu0
    %v226 = vadd.f32 %v83, %v225
    %v227 = vpop.f32.mrb[0].mxu0
    %228 = vmatprep.mubr.f32.mxu0 0.0
    %229 = vmatmul.mubr.f32.gmra.mrb[0].mxu0 %v105
    %v230 = vpop.f32.mrb[0].mxu0
    %v231 = vadd.f32 %v83, %v230
    %v232 = vpop.f32.mrb[0].mxu0
    %233 = vmatprep.mubr.f32.mxu0 0.0
    %234 = vmatmul.mubr.f32.gmra.mrb[0].mxu0 %v108
    %v235 = vpop.f32.mrb[0].mxu0
    %v236 = vadd.f32 %v83, %v235
    %v237 = vpop.f32.mrb[0].mxu0
    %238 = vmatprep.mubr.f32.mxu0 0.0
    %239 = vmatmul.mubr.f32.gmra.mrb[0].mxu0 %v111
    %v240 = vpop.f32.mrb[0].mxu0
    %v241 = vadd.f32 %v83, %v240
    %v242 = vpop.f32.mrb[0].mxu0
    %243 = vmatprep.mubr.f32.mxu0 0.0
    %244 = vmatmul.mubr.f32.gmra.mrb[0].mxu0 %v114
    %v245 = vpop.f32.mrb[0].mxu0
    %v246 = vadd.f32 %v83, %v245
    %v247 = vpop.f32.mrb[0].mxu0
    %248 = vmatprep.mubr.f32.mxu0 0.0
    %249 = vmatmul.mubr.f32.gmra.mrb[0].mxu0 %v117
    %v250 = vpop.f32.mrb[0].mxu0
    %v251 = vadd.f32 %v83, %v250
    %v252 = vpop.f32.mrb[0].mxu0
    %253 = vmatprep.mubr.f32.mxu0 0.0
    %254 = vmatmul.mubr.f32.gmra.mrb[0].mxu0 %v120
    %v255 = vpop.f32.mrb[0].mxu0
    %v256 = vadd.f32 %v83, %v255
    %v257 = vpop.f32.mrb[0].mxu0
    %258 = vmatprep.mubr.f32.mxu0 0.0
    %259 = vmatmul.mubr.f32.gmra.mrb[0].mxu0 %v123
    %v260 = vpop.f32.mrb[0].mxu0
    %v261 = vadd.f32 %v83, %v260
    %v262 = vpop.f32.mrb[0].mxu0
    %263 = vmatprep.mubr.f32.mxu0 0.0
    %264 = vmatmul.mubr.f32.gmra.mrb[0].mxu0 %v126
    %v265 = vpop.f32.mrb[0].mxu0
    %v266 = vadd.f32 %v83, %v265
    %v267 = vpop.f32.mrb[0].mxu0
    %268 = vmatprep.mubr.f32.mxu0 0.0
    %269 = vmatmul.mubr.f32.gmra.mrb[0].mxu0 %v129
    %v270 = vpop.f32.mrb[0].mxu0
    %v271 = vadd.f32 %v83, %v270
    %v272 = vpop.f32.mrb[0].mxu0
    %273 = vmatprep.mubr.f32.mxu0 0.0
    %274 = vmatmul.mubr.f32.gmra.mrb[0].mxu0 %v132
    %v275 = vpop.f32.mrb[0].mxu0
    %v276 = vadd.f32 %v83, %v275
    %v277 = vpop.f32.mrb[0].mxu0
    %278 = vdwg.mxu0
    %v279 = vmax.f32 %v201, 0.0
    %v280 = vmax.f32 %v206, 0.0
    %v281 = vmax.f32 %v211, 0.0
    %v282 = vmax.f32 %v216, 0.0
    %v283 = vmax.f32 %v221, 0.0
    %v284 = vmax.f32 %v226, 0.0
    %v285 = vmax.f32 %v231, 0.0
    %v286 = vmax.f32 %v236, 0.0
    %v287 = vmax.f32 %v241, 0.0
    %v288 = vmax.f32 %v246, 0.0
    %v289 = vmax.f32 %v251, 0.0
    %v290 = vmax.f32 %v256, 0.0
    %v291 = vmax.f32 %v261, 0.0
    %v292 = vmax.f32 %v266, 0.0
    %v293 = vmax.f32 %v271, 0.0
    %v294 = vmax.f32 %v276, 0.0
    %v295 = vld [vmem:[#allocation4] sm:$0xff]
    %v296 = vld [vmem:[#allocation4 + $0x8] sm:$0xff]
    %v297 = vld [vmem:[#allocation4 + $0x10] sm:$0xff]
    %v298 = vld [vmem:[#allocation4 + $0x18] sm:$0xff]
    %v299 = vld [vmem:[#allocation4 + $0x20] sm:$0xff]
    %v300 = vld [vmem:[#allocation4 + $0x28] sm:$0xff]
    %v301 = vld [vmem:[#allocation4 + $0x30] sm:$0xff]
    %v302 = vld [vmem:[#allocation4 + $0x38] sm:$0xff]
    %v303 = vld [vmem:[#allocation4 + $0x40] sm:$0xff]
    %v304 = vld [vmem:[#allocation4 + $0x48] sm:$0xff]
    %v305 = vld [vmem:[#allocation4 + $0x50] sm:$0xff]
    %v306 = vld [vmem:[#allocation4 + $0x58] sm:$0xff]
    %v307 = vld [vmem:[#allocation4 + $0x60] sm:$0xff]
    %v308 = vld [vmem:[#allocation4 + $0x68] sm:$0xff]
    %v309 = vld [vmem:[#allocation4 + $0x70] sm:$0xff]
    %v310 = vld [vmem:[#allocation4 + $0x78] sm:$0xff]
    %v311 = vld [vmem:[%s4] sm:$0x1]
    %v313 = vlaneseq
    %v314 = vshrl.u32 %v313, 7
    %v315 = vsub.s32 0, %v314
    %v316 = vrot.slane %v311, %v315
    %318 = vmatprep.subr.mxu0 0.0
    %319 = vmatpush1.msra.mxu0 %v295
    %320 = vmatprep.subr.mxu0 0.0
    %321 = vmatpush1.msra.mxu0 %v296
    %322 = vmatprep.subr.mxu0 0.0
    %323 = vmatpush1.msra.mxu0 %v297
    %324 = vmatprep.subr.mxu0 0.0
    %325 = vmatpush1.msra.mxu0 %v298
    %326 = vmatprep.subr.mxu0 0.0
    %327 = vmatpush1.msra.mxu0 %v299
    %328 = vmatprep.subr.mxu0 0.0
    %329 = vmatpush1.msra.mxu0 %v300
    %330 = vmatprep.subr.mxu0 0.0
    %331 = vmatpush1.msra.mxu0 %v301
    %332 = vmatprep.subr.mxu0 0.0
    %333 = vmatpush1.msra.mxu0 %v302
    %334 = vmatprep.subr.mxu0 0.0
    %335 = vmatpush1.msra.mxu0 %v303
    %336 = vmatprep.subr.mxu0 0.0
    %337 = vmatpush1.msra.mxu0 %v304
    %338 = vmatprep.subr.mxu0 0.0
    %339 = vmatpush1.msra.mxu0 %v305
    %340 = vmatprep.subr.mxu0 0.0
    %341 = vmatpush1.msra.mxu0 %v306
    %342 = vmatprep.subr.mxu0 0.0
    %343 = vmatpush1.msra.mxu0 %v307
    %344 = vmatprep.subr.mxu0 0.0
    %345 = vmatpush1.msra.mxu0 %v308
    %346 = vmatprep.subr.mxu0 0.0
    %347 = vmatpush1.msra.mxu0 %v309
    %348 = vmatprep.subr.mxu0 0.0
    %349 = vmatpush1.msra.mxu0 %v310
    %350 = vmatprep.subr.mxu0 0.0
    %351 = vmatpush1.msra.mxu0 0.0
    %352 = vmatprep.subr.mxu0 0.0
    %353 = vmatpush1.msra.mxu0 0.0
    %354 = vmatprep.subr.mxu0 0.0
    %355 = vmatpush1.msra.mxu0 0.0
    %356 = vmatprep.subr.mxu0 0.0
    %357 = vmatpush1.msra.mxu0 0.0
    %358 = vmatprep.subr.mxu0 0.0
    %359 = vmatpush1.msra.mxu0 0.0
    %360 = vmatprep.subr.mxu0 0.0
    %361 = vmatpush1.msra.mxu0 0.0
    %362 = vmatprep.subr.mxu0 0.0
    %363 = vmatpush1.msra.mxu0 0.0
    %364 = vmatprep.subr.mxu0 0.0
    %365 = vmatpush1.msra.mxu0 0.0
    %366 = vmatprep.subr.mxu0 0.0
    %367 = vmatpush1.msra.mxu0 0.0
    %368 = vmatprep.subr.mxu0 0.0
    %369 = vmatpush1.msra.mxu0 0.0
    %370 = vmatprep.subr.mxu0 0.0
    %371 = vmatpush1.msra.mxu0 0.0
    %372 = vmatprep.subr.mxu0 0.0
    %373 = vmatpush1.msra.mxu0 0.0
    %374 = vmatprep.subr.mxu0 0.0
    %375 = vmatpush1.msra.mxu0 0.0
    %376 = vmatprep.subr.mxu0 0.0
    %377 = vmatpush1.msra.mxu0 0.0
    %378 = vmatprep.subr.mxu0 0.0
    %379 = vmatpush1.msra.mxu0 0.0
    %380 = vmatprep.subr.mxu0 0.0
    %381 = vmatpush1.msra.mxu0 0.0
    %382 = vmatprep.mubr.f32.mxu0 0.0
    %383 = vmatmul.mubr.f32.gmra.mrb[0].mxu0 %v279
    %v384 = vpop.f32.mrb[0].mxu0
    %v385 = vadd.f32 %v316, %v384
    %v386 = vpop.f32.mrb[0].mxu0
    %387 = vmatprep.mubr.f32.mxu0 0.0
    %388 = vmatmul.mubr.f32.gmra.mrb[0].mxu0 %v280
    %v389 = vpop.f32.mrb[0].mxu0
    %v390 = vadd.f32 %v316, %v389
    %v391 = vpop.f32.mrb[0].mxu0
    %392 = vmatprep.mubr.f32.mxu0 0.0
    %393 = vmatmul.mubr.f32.gmra.mrb[0].mxu0 %v281
    %v394 = vpop.f32.mrb[0].mxu0
    %v395 = vadd.f32 %v316, %v394
    %v396 = vpop.f32.mrb[0].mxu0
    %397 = vmatprep.mubr.f32.mxu0 0.0
    %398 = vmatmul.mubr.f32.gmra.mrb[0].mxu0 %v282
    %v399 = vpop.f32.mrb[0].mxu0
    %v400 = vadd.f32 %v316, %v399
    %v401 = vpop.f32.mrb[0].mxu0
    %402 = vmatprep.mubr.f32.mxu0 0.0
    %403 = vmatmul.mubr.f32.gmra.mrb[0].mxu0 %v283
    %v404 = vpop.f32.mrb[0].mxu0
    %v405 = vadd.f32 %v316, %v404
    %v406 = vpop.f32.mrb[0].mxu0
    %407 = vmatprep.mubr.f32.mxu0 0.0
    %408 = vmatmul.mubr.f32.gmra.mrb[0].mxu0 %v284
    %v409 = vpop.f32.mrb[0].mxu0
    %v410 = vadd.f32 %v316, %v409
    %v411 = vpop.f32.mrb[0].mxu0
    %412 = vmatprep.mubr.f32.mxu0 0.0
    %413 = vmatmul.mubr.f32.gmra.mrb[0].mxu0 %v285
    %v414 = vpop.f32.mrb[0].mxu0
    %v415 = vadd.f32 %v316, %v414
    %v416 = vpop.f32.mrb[0].mxu0
    %417 = vmatprep.mubr.f32.mxu0 0.0
    %418 = vmatmul.mubr.f32.gmra.mrb[0].mxu0 %v286
    %v419 = vpop.f32.mrb[0].mxu0
    %v420 = vadd.f32 %v316, %v419
    %v421 = vpop.f32.mrb[0].mxu0
    %422 = vmatprep.mubr.f32.mxu0 0.0
    %423 = vmatmul.mubr.f32.gmra.mrb[0].mxu0 %v287
    %v424 = vpop.f32.mrb[0].mxu0
    %v425 = vadd.f32 %v316, %v424
    %v426 = vpop.f32.mrb[0].mxu0
    %427 = vmatprep.mubr.f32.mxu0 0.0
    %428 = vmatmul.mubr.f32.gmra.mrb[0].mxu0 %v288
    %v429 = vpop.f32.mrb[0].mxu0
    %v430 = vadd.f32 %v316, %v429
    %v431 = vpop.f32.mrb[0].mxu0
    %432 = vmatprep.mubr.f32.mxu0 0.0
    %433 = vmatmul.mubr.f32.gmra.mrb[0].mxu0 %v289
    %v434 = vpop.f32.mrb[0].mxu0
    %v435 = vadd.f32 %v316, %v434
    %v436 = vpop.f32.mrb[0].mxu0
    %437 = vmatprep.mubr.f32.mxu0 0.0
    %438 = vmatmul.mubr.f32.gmra.mrb[0].mxu0 %v290
    %v439 = vpop.f32.mrb[0].mxu0
    %v440 = vadd.f32 %v316, %v439
    %v441 = vpop.f32.mrb[0].mxu0
    %442 = vmatprep.mubr.f32.mxu0 0.0
    %443 = vmatmul.mubr.f32.gmra.mrb[0].mxu0 %v291
    %v444 = vpop.f32.mrb[0].mxu0
    %v445 = vadd.f32 %v316, %v444
    %v446 = vpop.f32.mrb[0].mxu0
    %447 = vmatprep.mubr.f32.mxu0 0.0
    %448 = vmatmul.mubr.f32.gmra.mrb[0].mxu0 %v292
    %v449 = vpop.f32.mrb[0].mxu0
    %v450 = vadd.f32 %v316, %v449
    %v451 = vpop.f32.mrb[0].mxu0
    %452 = vmatprep.mubr.f32.mxu0 0.0
    %453 = vmatmul.mubr.f32.gmra.mrb[0].mxu0 %v293
    %v454 = vpop.f32.mrb[0].mxu0
    %v455 = vadd.f32 %v316, %v454
    %v456 = vpop.f32.mrb[0].mxu0
    %457 = vmatprep.mubr.f32.mxu0 0.0
    %458 = vmatmul.mubr.f32.gmra.mrb[0].mxu0 %v294
    %v459 = vpop.f32.mrb[0].mxu0
    %v460 = vadd.f32 %v316, %v459
    %v461 = vpop.f32.mrb[0].mxu0
    %462 = vdwg.mxu0
    %v463 = vmax.f32 %v385, 0.0
    %v464 = vmax.f32 %v390, 0.0
    %v465 = vmax.f32 %v395, 0.0
    %v466 = vmax.f32 %v400, 0.0
    %v467 = vmax.f32 %v405, 0.0
    %v468 = vmax.f32 %v410, 0.0
    %v469 = vmax.f32 %v415, 0.0
    %v470 = vmax.f32 %v420, 0.0
    %v471 = vmax.f32 %v425, 0.0
    %v472 = vmax.f32 %v430, 0.0
    %v473 = vmax.f32 %v435, 0.0
    %v474 = vmax.f32 %v440, 0.0
    %v475 = vmax.f32 %v445, 0.0
    %v476 = vmax.f32 %v450, 0.0
    %v477 = vmax.f32 %v455, 0.0
    %v478 = vmax.f32 %v460, 0.0
    %v479 = vld [vmem:[%s5] sm:$0xff]
    %v480 = vld [vmem:[%s6] sm:$0xff]
    %482 = vset.pattern.permute.xlu0 0
    %483 = vperm.xlu0 %482, %v480
    %v484 = vpop.permute.xlu0 %483
    %486 = vmatprep.subr.mxu0 0.0
    %487 = vmatpush1.xpose.msra.mxu0 %v463
    %488 = vmatprep.subr.mxu0 0.0
    %489 = vmatpush1.xpose.msra.mxu0 %v464
    %490 = vmatprep.subr.mxu0 0.0
    %491 = vmatpush1.xpose.msra.mxu0 %v465
    %492 = vmatprep.subr.mxu0 0.0
    %493 = vmatpush1.xpose.msra.mxu0 %v466
    %494 = vmatprep.subr.mxu0 0.0
    %495 = vmatpush1.xpose.msra.mxu0 %v467
    %496 = vmatprep.subr.mxu0 0.0
    %497 = vmatpush1.xpose.msra.mxu0 %v468
    %498 = vmatprep.subr.mxu0 0.0
    %499 = vmatpush1.xpose.msra.mxu0 %v469
    %500 = vmatprep.subr.mxu0 0.0
    %501 = vmatpush1.xpose.msra.mxu0 %v470
    %502 = vmatprep.subr.mxu0 0.0
    %503 = vmatpush1.xpose.msra.mxu0 %v471
    %504 = vmatprep.subr.mxu0 0.0
    %505 = vmatpush1.xpose.msra.mxu0 %v472
    %506 = vmatprep.subr.mxu0 0.0
    %507 = vmatpush1.xpose.msra.mxu0 %v473
    %508 = vmatprep.subr.mxu0 0.0
    %509 = vmatpush1.xpose.msra.mxu0 %v474
    %510 = vmatprep.subr.mxu0 0.0
    %511 = vmatpush1.xpose.msra.mxu0 %v475
    %512 = vmatprep.subr.mxu0 0.0
    %513 = vmatpush1.xpose.msra.mxu0 %v476
    %514 = vmatprep.subr.mxu0 0.0
    %515 = vmatpush1.xpose.msra.mxu0 %v477
    %516 = vmatprep.subr.mxu0 0.0
    %517 = vmatpush1.xpose.msra.mxu0 %v478
    %518 = vmatprep.subr.mxu0 0.0
    %519 = vmatpush1.xpose.msra.mxu0 0.0
    %520 = vmatprep.subr.mxu0 0.0
    %521 = vmatpush1.xpose.msra.mxu0 0.0
    %522 = vmatprep.subr.mxu0 0.0
    %523 = vmatpush1.xpose.msra.mxu0 0.0
    %524 = vmatprep.subr.mxu0 0.0
    %525 = vmatpush1.xpose.msra.mxu0 0.0
    %526 = vmatprep.subr.mxu0 0.0
    %527 = vmatpush1.xpose.msra.mxu0 0.0
    %528 = vmatprep.subr.mxu0 0.0
    %529 = vmatpush1.xpose.msra.mxu0 0.0
    %530 = vmatprep.subr.mxu0 0.0
    %531 = vmatpush1.xpose.msra.mxu0 0.0
    %532 = vmatprep.subr.mxu0 0.0
    %533 = vmatpush1.xpose.msra.mxu0 0.0
    %534 = vmatprep.subr.mxu0 0.0
    %535 = vmatpush1.xpose.msra.mxu0 0.0
    %536 = vmatprep.subr.mxu0 0.0
    %537 = vmatpush1.xpose.msra.mxu0 0.0
    %538 = vmatprep.subr.mxu0 0.0
    %539 = vmatpush1.xpose.msra.mxu0 0.0
    %540 = vmatprep.subr.mxu0 0.0
    %541 = vmatpush1.xpose.msra.mxu0 0.0
    %542 = vmatprep.subr.mxu0 0.0
    %543 = vmatpush1.xpose.msra.mxu0 0.0
    %544 = vmatprep.subr.mxu0 0.0
    %545 = vmatpush1.xpose.msra.mxu0 0.0
    %546 = vmatprep.subr.mxu0 0.0
    %547 = vmatpush1.xpose.msra.mxu0 0.0
    %548 = vmatprep.subr.mxu0 0.0
    %549 = vmatpush1.xpose.msra.mxu0 0.0
    %550 = vmatprep.mubr.f32.mxu0 0.0
    %551 = vmatmul.mubr.f32.gmra.mrb[0].mxu0 %v479
    %v552 = vpop.f32.mrb[0].mxu0
    %v553 = vadd.f32 %v484, %v552
    %v554 = vpop.f32.mrb[0].mxu0
    %555 = vdwg.mxu0
    %556 = vst [vmem:[%s7] sm:$0xff] %v553
    // Predicated region
    $region38: #{tpu_custom_call.1} parent=1 // pred_check
      _
    $region39: #{tpu_custom_call.1} parent=1 // pred_check_branch
      %558 = sbr.rel (0) target = $region41
    $region40: #{tpu_custom_call.1} parent=1 // pred_region
      _
    $region41: #{tpu_custom_call.1} parent=1 // pred_fallthru
      _
    // Predicated region
    $region42: #{tpu_custom_call.1} parent=1 // pred_check
      _
    $region43: #{tpu_custom_call.1} parent=1 // pred_check_branch
      %560 = sbr.rel (0) target = $region45
    $region44: #{tpu_custom_call.1} parent=1 // pred_region
      _
    $region45: #{tpu_custom_call.1} parent=1 // pred_fallthru
      _
    %561 = vsyncpa [#allocation3], 1
    %562 = vsyncpa [#allocation5], 1

</llo_original>
